<compile_context>
chip_gen: v7x
topology: tpu7x:2x2x1
jax: 0.10.0
libtpu: 0.0.40
codegen_flags: <defaults>
</compile_context>

<pallas_src>
import functools

import jax
import jax.numpy as jnp
from jax.experimental import pallas as pl
from jax.experimental.pallas import tpu as pltpu

_H1 = 32          # encoder hidden 1
_H2 = 64          # encoder hidden 2
_HEAD_PAD = 128   # lane-dense fused-head width: [policy | value | zeros]


def _round_up(x, m):
    return ((x + m - 1) // m) * m


def _cdiv(a, b):
    return (a + b - 1) // b


def _num_tensorcores():
    """2 TensorCores per chip on v7x, 1 on v5e/v6e.  Best effort."""
    try:
        kind = jax.devices()[0].device_kind.lower()
        return 2 if "v7" in kind else 1
    except Exception:
        return 1


def _actor_critic_kernel(x_ref, w1_ref, b1_ref, w2_ref, b2_ref,
                         wh_ref, bh_ref, out_ref):
    """Fused encoder + (policy|value) heads for one batch tile.

    x_ref  : (tb, obs)       f32  (cast to bf16 in-kernel)
    w1_ref : (obs, 32)  bf16, b1_ref : (1, 32)  f32
    w2_ref : (32, 64)   bf16, b2_ref : (1, 64)  f32
    wh_ref : (64, 128)  bf16, bh_ref : (1, 128) f32  (zero-padded fused heads)
    out_ref: (tb, 128)  bf16
    """
    x = x_ref[...].astype(jnp.bfloat16)          # in-kernel cast (VPU has slack)

    # encoder layer 1: Linear(obs, 32) + ReLU (f32 accumulate / elementwise)
    h1 = jnp.dot(x, w1_ref[...], preferred_element_type=jnp.float32)
    h1 = jnp.maximum(h1 + b1_ref[...], 0.0)

    # encoder layer 2: Linear(32, 64) + ReLU
    h2 = jnp.dot(h1.astype(jnp.bfloat16), w2_ref[...],
                 preferred_element_type=jnp.float32)
    h2 = jnp.maximum(h2 + b2_ref[...], 0.0)

    # fused policy + value heads: one (64,128) matmul, lane-dense bf16 store
    heads = jnp.dot(h2.astype(jnp.bfloat16), wh_ref[...],
                    preferred_element_type=jnp.float32)
    out_ref[...] = (heads + bh_ref[...]).astype(out_ref.dtype)


def pack_params(params):
    """One-time packing: fused zero-padded head weights + bf16 casts.

    Call once at init; do NOT re-run per forward pass.
    """
    action_dim = params["wp"].shape[1]
    assert action_dim + 1 <= _HEAD_PAD, "action_dim too large for 128-lane head"

    wh = jnp.zeros((_H2, _HEAD_PAD), jnp.float32)
    wh = wh.at[:, :action_dim].set(params["wp"])
    wh = wh.at[:, action_dim].set(params["wv"][:, 0])
    bh = jnp.zeros((1, _HEAD_PAD), jnp.float32)
    bh = bh.at[:, :action_dim].set(params["bp"])
    bh = bh.at[:, action_dim].set(params["bv"][:, 0])

    return {
        "w1": params["w1"].astype(jnp.bfloat16),
        "b1": params["b1"].astype(jnp.float32),
        "w2": params["w2"].astype(jnp.bfloat16),
        "b2": params["b2"].astype(jnp.float32),
        "wh": wh.astype(jnp.bfloat16),
        "bh": bh.astype(jnp.float32),
    }


@functools.partial(jax.jit,
                   static_argnames=("action_dim", "batch_tile", "num_cores"))
def _forward_impl(local_obs, packed, *, action_dim, batch_tile, num_cores):
    B, obs_dim = local_obs.shape

    # ---- batch tiling: few steps, minimal padding, >=2 steps on v7x ----
    n_steps = max(1, _cdiv(B, batch_tile))
    if num_cores > 1 and B >= 2 * 16:
        n_steps = _round_up(max(n_steps, num_cores), num_cores)
    tb = _round_up(_cdiv(B, n_steps), 16)        # 16: bf16 sublane packing
    b_pad = _round_up(B, tb)
    grid = (b_pad // tb,)

    x = local_obs if b_pad == B else jnp.pad(local_obs,
                                             ((0, b_pad - B), (0, 0)))

    # grid-invariant (weight/bias) blocks
    def inv(shape):
        return pl.BlockSpec(shape, lambda i: (0,) * len(shape))

    flops = 2 * b_pad * (obs_dim * _H1 + _H1 * _H2 + _H2 * _HEAD_PAD)
    bytes_accessed = (
        b_pad * obs_dim * 4                                    # x read (f32)
        + b_pad * _HEAD_PAD * 2                                # out write (bf16)
        + (obs_dim * _H1 + _H1 * _H2 + _H2 * _HEAD_PAD) * 2    # bf16 weights
        + (_H1 + _H2 + _HEAD_PAD) * 4)                         # f32 biases

    out = pl.pallas_call(
        _actor_critic_kernel,
        out_shape=jax.ShapeDtypeStruct((b_pad, _HEAD_PAD), jnp.bfloat16),
        grid=grid,
        in_specs=[
            pl.BlockSpec((tb, obs_dim), lambda i: (i, 0)),     # x: batch-tiled
            inv((obs_dim, _H1)), inv((1, _H1)),                # w1, b1
            inv((_H1, _H2)), inv((1, _H2)),                    # w2, b2
            inv((_H2, _HEAD_PAD)), inv((1, _HEAD_PAD)),        # fused head
        ],
        out_specs=pl.BlockSpec((tb, _HEAD_PAD), lambda i: (i, 0)),
        compiler_params=pltpu.CompilerParams(
            dimension_semantics=("parallel",)),
        cost_estimate=pl.CostEstimate(
            flops=flops, transcendentals=0, bytes_accessed=bytes_accessed),
    )(x, packed["w1"], packed["b1"], packed["w2"], packed["b2"],
      packed["wh"], packed["bh"])

    # NOTE: padded head columns are garbage for a distribution — the slice to
    # action_dim MUST happen before any softmax.  Slices + f32 casts fuse
    # under jit (value kept as f32 externally; bf16 writeback is the only
    # precision loss — validated against the f32 reference below).
    logit = out[:B, :action_dim].astype(jnp.float32)
    value = out[:B, action_dim:action_dim + 1].astype(jnp.float32)
    return {"logit": logit, "value": value}


def actor_critic_forward(local_obs, packed, action_dim, *, batch_tile=2048):
    """Fused Actor-Critic forward pass.

    local_obs: (B, obs_dim) float32
    packed:    output of pack_params(init_params(...))
    Returns:   dict {'logit': (B, action_dim), 'value': (B, 1)} float32.
    """
    return _forward_impl(local_obs, packed,
                         action_dim=action_dim,
                         batch_tile=batch_tile,
                         num_cores=_num_tensorcores())


def init_params(key, obs_dim, action_dim):
    """Deterministic parameter init mimicking nn.Linear defaults (uniform
    +/- 1/sqrt(fan_in)).  Weights stored pre-transposed as (in, out)."""
    def linear(k, fan_in, fan_out):
        kw, kb = jax.random.split(k)
        bound = 1.0 / jnp.sqrt(fan_in)
        w = jax.random.uniform(kw, (fan_in, fan_out), jnp.float32, -bound, bound)
        b = jax.random.uniform(kb, (1, fan_out), jnp.float32, -bound, bound)
        return w, b

    k1, k2, k3, k4 = jax.random.split(key, 4)
    w1, b1 = linear(k1, obs_dim, _H1)
    w2, b2 = linear(k2, _H1, _H2)
    wp, bp = linear(k3, _H2, action_dim)
    wv, bv = linear(k4, _H2, 1)
    return {"w1": w1, "b1": b1, "w2": w2, "b2": b2,
            "wp": wp, "bp": bp, "wv": wv, "bv": bv}


def _reference_forward(local_obs, params):
    """Pure-JAX f32 reference for correctness checking."""
    h = jnp.maximum(local_obs @ params["w1"] + params["b1"], 0.0)
    h = jnp.maximum(h @ params["w2"] + params["b2"], 0.0)
    return {"logit": h @ params["wp"] + params["bp"],
            "value": h @ params["wv"] + params["bv"]}


if __name__ == "__main__":
    obs_dim, action_dim, batch = 16, 6, 8

    key = jax.random.PRNGKey(0)
    k_obs, k_params = jax.random.split(key)
    local_obs = jax.random.normal(k_obs, (batch, obs_dim), jnp.float32)

    params = init_params(k_params, obs_dim, action_dim)
    packed = pack_params(params)          # one-time host-side packing

    out = actor_critic_forward(local_obs, packed, action_dim)
    jax.block_until_ready(out)

    ref = _reference_forward(local_obs, params)
    assert out["logit"].shape == (batch, action_dim)
    assert out["value"].shape == (batch, 1)
    # bf16 MXU operands + bf16 writeback with f32 accumulation -> loose tol.
    assert jnp.allclose(out["logit"], ref["logit"], atol=3e-2, rtol=3e-2)
    assert jnp.allclose(out["value"], ref["value"], atol=3e-2, rtol=3e-2)

    # TODO(synk): ttorch.as_tensor dict wrapper has no Pallas/JAX equivalent;
    # a plain Python dict of arrays is returned instead.
    print("KERNEL_OK")
</pallas_src>

<mosaic_0001>
module attributes {stable_mosaic.version = 11 : i64} {
  func.func @_actor_critic_kernel(%arg0: i32, %arg1: memref<16x16xf32, #tpu.memory_space<vmem>>, %arg2: memref<16x32xbf16, #tpu.memory_space<vmem>>, %arg3: memref<1x32xf32, #tpu.memory_space<vmem>>, %arg4: memref<32x64xbf16, #tpu.memory_space<vmem>>, %arg5: memref<1x64xf32, #tpu.memory_space<vmem>>, %arg6: memref<64x128xbf16, #tpu.memory_space<vmem>>, %arg7: memref<1x128xf32, #tpu.memory_space<vmem>>, %arg8: memref<16x128xbf16, #tpu.memory_space<vmem>>) attributes {dimension_semantics = [#tpu.dimension_semantics<parallel>], iteration_bounds = array<i64: 1>, scalar_prefetch = 0 : i64, scratch_operands = 0 : i64, tpu.core_type = #tpu.core_type<tc>, window_params = [{transform_indices = @transform_0, window_bounds = array<i64: 16, 16>}, {pipeline_mode = #tpu.pipeline_mode<synchronous>, transform_indices = @transform_1, window_bounds = array<i64: 16, 32>}, {pipeline_mode = #tpu.pipeline_mode<synchronous>, transform_indices = @transform_2, window_bounds = array<i64: 1, 32>}, {pipeline_mode = #tpu.pipeline_mode<synchronous>, transform_indices = @transform_3, window_bounds = array<i64: 32, 64>}, {pipeline_mode = #tpu.pipeline_mode<synchronous>, transform_indices = @transform_4, window_bounds = array<i64: 1, 64>}, {pipeline_mode = #tpu.pipeline_mode<synchronous>, transform_indices = @transform_5, window_bounds = array<i64: 64, 128>}, {pipeline_mode = #tpu.pipeline_mode<synchronous>, transform_indices = @transform_6, window_bounds = array<i64: 1, 128>}, {transform_indices = @transform_7, window_bounds = array<i64: 16, 128>}]} {
    %c0 = arith.constant 0 : index
    %c0_0 = arith.constant 0 : index
    %0 = vector.load %arg1[%c0, %c0_0] : memref<16x16xf32, #tpu.memory_space<vmem>>, vector<16x16xf32>
    %1 = arith.truncf %0 : vector<16x16xf32> to vector<16x16xbf16>
    %c0_1 = arith.constant 0 : index
    %c0_2 = arith.constant 0 : index
    %2 = vector.load %arg2[%c0_1, %c0_2] : memref<16x32xbf16, #tpu.memory_space<vmem>>, vector<16x32xbf16>
    %cst = arith.constant dense<0.000000e+00> : vector<16x32xf32>
    %3 = tpu.matmul %1, %2, %cst {dimension_numbers = #tpu.dot_dimension_numbers<[1], [0], [0], [1], [0, 0, 1, 1], [], []>} : vector<16x16xbf16>, vector<16x32xbf16>, vector<16x32xf32> -> vector<16x32xf32>
    %c0_3 = arith.constant 0 : index
    %c0_4 = arith.constant 0 : index
    %4 = vector.load %arg3[%c0_3, %c0_4] : memref<1x32xf32, #tpu.memory_space<vmem>>, vector<1x32xf32>
    %5 = vector.broadcast %4 : vector<1x32xf32> to vector<16x32xf32>
    %6 = arith.addf %3, %5 : vector<16x32xf32>
    %cst_5 = arith.constant 0.000000e+00 : f32
    %7 = vector.broadcast %cst_5 : f32 to vector<16x32xf32>
    %8 = arith.maximumf %6, %7 : vector<16x32xf32>
    %9 = arith.truncf %8 : vector<16x32xf32> to vector<16x32xbf16>
    %c0_6 = arith.constant 0 : index
    %c0_7 = arith.constant 0 : index
    %10 = vector.load %arg4[%c0_6, %c0_7] : memref<32x64xbf16, #tpu.memory_space<vmem>>, vector<32x64xbf16>
    %cst_8 = arith.constant dense<0.000000e+00> : vector<16x64xf32>
    %11 = tpu.matmul %9, %10, %cst_8 {dimension_numbers = #tpu.dot_dimension_numbers<[1], [0], [0], [1], [0, 0, 1, 1], [], []>} : vector<16x32xbf16>, vector<32x64xbf16>, vector<16x64xf32> -> vector<16x64xf32>
    %c0_9 = arith.constant 0 : index
    %c0_10 = arith.constant 0 : index
    %12 = vector.load %arg5[%c0_9, %c0_10] : memref<1x64xf32, #tpu.memory_space<vmem>>, vector<1x64xf32>
    %13 = vector.broadcast %12 : vector<1x64xf32> to vector<16x64xf32>
    %14 = arith.addf %11, %13 : vector<16x64xf32>
    %cst_11 = arith.constant 0.000000e+00 : f32
    %15 = vector.broadcast %cst_11 : f32 to vector<16x64xf32>
    %16 = arith.maximumf %14, %15 : vector<16x64xf32>
    %17 = arith.truncf %16 : vector<16x64xf32> to vector<16x64xbf16>
    %c0_12 = arith.constant 0 : index
    %c0_13 = arith.constant 0 : index
    %18 = vector.load %arg6[%c0_12, %c0_13] : memref<64x128xbf16, #tpu.memory_space<vmem>>, vector<64x128xbf16>
    %cst_14 = arith.constant dense<0.000000e+00> : vector<16x128xf32>
    %19 = tpu.matmul %17, %18, %cst_14 {dimension_numbers = #tpu.dot_dimension_numbers<[1], [0], [0], [1], [0, 0, 1, 1], [], []>} : vector<16x64xbf16>, vector<64x128xbf16>, vector<16x128xf32> -> vector<16x128xf32>
    %c0_15 = arith.constant 0 : index
    %c0_16 = arith.constant 0 : index
    %20 = vector.load %arg7[%c0_15, %c0_16] : memref<1x128xf32, #tpu.memory_space<vmem>>, vector<1x128xf32>
    %21 = vector.broadcast %20 : vector<1x128xf32> to vector<16x128xf32>
    %22 = arith.addf %19, %21 : vector<16x128xf32>
    %23 = arith.truncf %22 : vector<16x128xf32> to vector<16x128xbf16>
    %c0_17 = arith.constant 0 : index
    %c0_18 = arith.constant 0 : index
    %24 = vector.load %arg8[%c0_17, %c0_18] : memref<16x128xbf16, #tpu.memory_space<vmem>>, vector<16x128xbf16>
    tpu.vector_store %arg8[%c0_17, %c0_18], %23 {strides = array<i32>} : memref<16x128xbf16, #tpu.memory_space<vmem>>, vector<16x128xbf16>,
    return
  }
  func.func @transform_0(%arg0: i32) -> (i32, i32) {
    %c0_i32 = arith.constant 0 : i32
    %c0_i32_0 = arith.constant 0 : i32
    return %arg0, %c0_i32 : i32, i32
  }
  func.func @transform_1(%arg0: i32) -> (i32, i32) {
    %c0_i32 = arith.constant 0 : i32
    %c0_i32_0 = arith.constant 0 : i32
    %c0_i32_1 = arith.constant 0 : i32
    return %c0_i32, %c0_i32_0 : i32, i32
  }
  func.func @transform_2(%arg0: i32) -> (i32, i32) {
    %c0_i32 = arith.constant 0 : i32
    %c0_i32_0 = arith.constant 0 : i32
    %c0_i32_1 = arith.constant 0 : i32
    return %c0_i32, %c0_i32_0 : i32, i32
  }
  func.func @transform_3(%arg0: i32) -> (i32, i32) {
    %c0_i32 = arith.constant 0 : i32
    %c0_i32_0 = arith.constant 0 : i32
    %c0_i32_1 = arith.constant 0 : i32
    return %c0_i32, %c0_i32_0 : i32, i32
  }
  func.func @transform_4(%arg0: i32) -> (i32, i32) {
    %c0_i32 = arith.constant 0 : i32
    %c0_i32_0 = arith.constant 0 : i32
    %c0_i32_1 = arith.constant 0 : i32
    return %c0_i32, %c0_i32_0 : i32, i32
  }
  func.func @transform_5(%arg0: i32) -> (i32, i32) {
    %c0_i32 = arith.constant 0 : i32
    %c0_i32_0 = arith.constant 0 : i32
    %c0_i32_1 = arith.constant 0 : i32
    return %c0_i32, %c0_i32_0 : i32, i32
  }
  func.func @transform_6(%arg0: i32) -> (i32, i32) {
    %c0_i32 = arith.constant 0 : i32
    %c0_i32_0 = arith.constant 0 : i32
    %c0_i32_1 = arith.constant 0 : i32
    return %c0_i32, %c0_i32_0 : i32, i32
  }
  func.func @transform_7(%arg0: i32) -> (i32, i32) {
    %c0_i32 = arith.constant 0 : i32
    %c0_i32_0 = arith.constant 0 : i32
    return %arg0, %c0_i32 : i32, i32
  }
}

</mosaic_0001>

<llo_original>
// kernel: _forward_impl.1
$region0: #{_forward_impl.1}
  #allocation0 [shape = 'u32[]', space=smem, size = 0x4, offset = 0x4, fixed_abs, tag = 'smem constant byte address 0x4 - core index']
  #allocation1 [shape = 'u32[144,128]{1,0:T(1,128)}', space=vmem, size = 0x12000, scoped, tag = 'internal scratch']
  %s0 = inlined_call_operand.vmem [shape: f32[16,16], index: 0, kind: input, shape index: {}]
  %s1 = inlined_call_operand.vmem [shape: bf16[16,32], index: 1, kind: input, shape index: {}]
  %s2 = inlined_call_operand.vmem [shape: f32[1,32], index: 2, kind: input, shape index: {}]
  %s3 = inlined_call_operand.hbm [shape: bf16[32,64], index: 3, kind: input, shape index: {}]
  %s4 = inlined_call_operand.vmem [shape: f32[1,64], index: 4, kind: input, shape index: {}]
  %s5 = inlined_call_operand.vmem [shape: bf16[64,128], index: 5, kind: input, shape index: {}]
  %s6 = inlined_call_operand.vmem [shape: f32[1,128], index: 6, kind: input, shape index: {}]
  %s7 = inlined_call_operand.vmem [shape: bf16[16,128], index: 7, kind: output, shape index: {}]
  %s8 = sld [smem:[#allocation0]]
  $region42: #{_forward_impl.1} parent=0
    _
  %s10 = ssub.s32 1, %s8
  %s11 = scalar_select 0, %s10, %s8
  $region1: #{_forward_impl.1} parent=0
    #allocation2 [shape = 'u8[8192]{0}', space=vmem, size = 0x2000, scoped, tag = 'input window, operand 3, single buffered']
    #allocation3 [shape = 's32[1]{0}', space=sflag, size = 0x4, scoped, tag = 'scoped memory for _forward_impl.1']
    %12 = vsyncpa [#allocation3], 0
    // Predicated region
    $region2: #{_forward_impl.1} parent=1 // pred_check
      _
    $region3: #{_forward_impl.1} parent=1 // pred_check_branch
      %14 = sbr.rel (0) target = $region5
    $region4: #{_forward_impl.1} parent=1 // pred_region
      _
    $region5: #{_forward_impl.1} parent=1 // pred_fallthru
      _
    // Predicated region
    $region6: #{_forward_impl.1} parent=1 // pred_check
      _
    $region7: #{_forward_impl.1} parent=1 // pred_check_branch
      %16 = sbr.rel (0) target = $region9
    $region8: #{_forward_impl.1} parent=1 // pred_region
      _
    $region9: #{_forward_impl.1} parent=1 // pred_fallthru
      _
    // Predicated region
    $region10: #{_forward_impl.1} parent=1 // pred_check
      _
    $region11: #{_forward_impl.1} parent=1 // pred_check_branch
      %18 = sbr.rel (0) target = $region13
    $region12: #{_forward_impl.1} parent=1 // pred_region
      _
    $region13: #{_forward_impl.1} parent=1 // pred_fallthru
      _
    // Predicated region
    $region14: #{_forward_impl.1} parent=1 // pred_check
      _
    $region15: #{_forward_impl.1} parent=1 // pred_check_branch
      %20 = sbr.rel (0) target = $region17
    $region16: #{_forward_impl.1} parent=1 // pred_region
      %s22 = ssub.s32 256, 256
      %23 = vsyncadd [#allocation3], %s22
      %s24 = sshll.u32 [#allocation2], 4
      %s25 = int_to_ptr.vmem [resolvable:$true] %s24
      %30 = dma.hbm_to_vmem [thread:$0]  %s3, 256, %s25, [#allocation3], 64, 64, 4
    $region17: #{_forward_impl.1} parent=1 // pred_fallthru
      _
    // Predicated region
    $region18: #{_forward_impl.1} parent=1 // pred_check
      _
    $region19: #{_forward_impl.1} parent=1 // pred_check_branch
      %32 = sbr.rel (0) target = $region21
    $region20: #{_forward_impl.1} parent=1 // pred_region
      _
    $region21: #{_forward_impl.1} parent=1 // pred_fallthru
      _
    // Predicated region
    $region22: #{_forward_impl.1} parent=1 // pred_check
      _
    $region23: #{_forward_impl.1} parent=1 // pred_check_branch
      %34 = sbr.rel (0) target = $region25
    $region24: #{_forward_impl.1} parent=1 // pred_region
      _
    $region25: #{_forward_impl.1} parent=1 // pred_fallthru
      _
    // Predicated region
    $region26: #{_forward_impl.1} parent=1 // pred_check
      _
    $region27: #{_forward_impl.1} parent=1 // pred_check_branch
      %36 = sbr.rel (0) target = $region29
    $region28: #{_forward_impl.1} parent=1 // pred_region
      _
    $region29: #{_forward_impl.1} parent=1 // pred_fallthru
      _
    // Predicated region
    $region30: #{_forward_impl.1} parent=1 // pred_check
      _
    $region31: #{_forward_impl.1} parent=1 // pred_check_branch
      %38 = sbr.rel (0) target = $region33
    $region32: #{_forward_impl.1} parent=1 // pred_region
      %39 = dma.done [#allocation3], 256
    $region33: #{_forward_impl.1} parent=1 // pred_fallthru
      _
    %v41 = vld [vmem:[%s0] sm:$0xff]
    %v42 = vld [vmem:[%s0 + $0x8] sm:$0xff]
    %v43 = vpack.c.bf16 %v42, %v41
    %v44 = vld [vmem:[%s1] sm:$0xf]
    %v45 = vld [vmem:[%s1 + $0x4] sm:$0xf]
    %v46 = vld [vmem:[%s2] sm:$0x1]
    %v48 = vlaneseq
    %v49 = vshrl.u32 %v48, 7
    %v50 = vsub.s32 0, %v49
    %v51 = vrot.slane %v46, %v50
    %v55 = vunpack.c.l.b16 %v44
    %v56 = vunpack.c.l.b16 %v45
    %v57 = vpack.c.b16 %v56, %v55
    %vm59 = vcmask 130048
    %v61 = vsel %vm59, %v43, 0
    %63 = vmatprep.subr.bf16.mxu0 0
    %64 = vmatpush1.bf16.msra.mxu0 %v57
    %65 = vmatprep.subr.bf16.mxu0 0
    %66 = vmatpush1.bf16.msra.mxu0 0
    %67 = vmatprep.subr.bf16.mxu0 0
    %68 = vmatpush1.bf16.msra.mxu0 0
    %69 = vmatprep.subr.bf16.mxu0 0
    %70 = vmatpush1.bf16.msra.mxu0 0
    %71 = vmatprep.subr.bf16.mxu0 0
    %72 = vmatpush1.bf16.msra.mxu0 0
    %73 = vmatprep.subr.bf16.mxu0 0
    %74 = vmatpush1.bf16.msra.mxu0 0
    %75 = vmatprep.subr.bf16.mxu0 0
    %76 = vmatpush1.bf16.msra.mxu0 0
    %77 = vmatprep.subr.bf16.mxu0 0
    %78 = vmatpush1.bf16.msra.mxu0 0
    %79 = vmatprep.subr.bf16.mxu0 0
    %80 = vmatpush1.bf16.msra.mxu0 0
    %81 = vmatprep.subr.bf16.mxu0 0
    %82 = vmatpush1.bf16.msra.mxu0 0
    %83 = vmatprep.subr.bf16.mxu0 0
    %84 = vmatpush1.bf16.msra.mxu0 0
    %85 = vmatprep.subr.bf16.mxu0 0
    %86 = vmatpush1.bf16.msra.mxu0 0
    %87 = vmatprep.subr.bf16.mxu0 0
    %88 = vmatpush1.bf16.msra.mxu0 0
    %89 = vmatprep.subr.bf16.mxu0 0
    %90 = vmatpush1.bf16.msra.mxu0 0
    %91 = vmatprep.subr.bf16.mxu0 0
    %92 = vmatpush1.bf16.msra.mxu0 0
    %93 = vmatprep.subr.bf16.mxu0 0
    %94 = vmatpush1.bf16.msra.mxu0 0
    %95 = vmatprep.mubr.bf16.mxu0 0
    %96 = vmatmul.mubr.bf16.gmra.mrb[0].mxu0 %v61
    %v97 = vpop.f32.mrb[0].mxu0
    %v98 = vadd.f32 %v51, %v97
    %v99 = vpop.f32.mrb[0].mxu0
    %v100 = vpop.f32.mrb[0].mxu0
    %v101 = vadd.f32 %v51, %v100
    %v102 = vpop.f32.mrb[0].mxu0
    %103 = vdwg.mxu0
    %v104 = vmax.f32 %v98, 0.0
    %v105 = vmax.f32 %v101, 0.0
    %v106 = vpack.c.bf16 %v105, %v104
    %v107 = vld [vmem:[#allocation2] sm:$0xf]
    %v108 = vld [vmem:[#allocation2 + $0x4] sm:$0xf]
    %v109 = vld [vmem:[#allocation2 + $0x8] sm:$0xf]
    %v110 = vld [vmem:[#allocation2 + $0xc] sm:$0xf]
    %v111 = vld [vmem:[%s4] sm:$0x1]
    %v113 = vlaneseq
    %v114 = vshrl.u32 %v113, 7
    %v115 = vsub.s32 0, %v114
    %v116 = vrot.slane %v111, %v115
    %v122 = vunpack.c.l.b16 %v107
    %v123 = vunpack.c.l.b16 %v108
    %v124 = vunpack.c.l.b16 %v109
    %v125 = vunpack.c.l.b16 %v110
    %v126 = vpack.c.b16 %v123, %v122
    %v127 = vpack.c.b16 %v125, %v124
    %vm130 = vcmask 261120
    %v132 = vsel %vm130, %v106, 0
    %134 = vmatprep.subr.bf16.mxu0 0
    %135 = vmatpush1.bf16.msra.mxu0 %v126
    %136 = vmatprep.subr.bf16.mxu0 0
    %137 = vmatpush1.bf16.msra.mxu0 %v127
    %138 = vmatprep.subr.bf16.mxu0 0
    %139 = vmatpush1.bf16.msra.mxu0 0
    %140 = vmatprep.subr.bf16.mxu0 0
    %141 = vmatpush1.bf16.msra.mxu0 0
    %142 = vmatprep.subr.bf16.mxu0 0
    %143 = vmatpush1.bf16.msra.mxu0 0
    %144 = vmatprep.subr.bf16.mxu0 0
    %145 = vmatpush1.bf16.msra.mxu0 0
    %146 = vmatprep.subr.bf16.mxu0 0
    %147 = vmatpush1.bf16.msra.mxu0 0
    %148 = vmatprep.subr.bf16.mxu0 0
    %149 = vmatpush1.bf16.msra.mxu0 0
    %150 = vmatprep.subr.bf16.mxu0 0
    %151 = vmatpush1.bf16.msra.mxu0 0
    %152 = vmatprep.subr.bf16.mxu0 0
    %153 = vmatpush1.bf16.msra.mxu0 0
    %154 = vmatprep.subr.bf16.mxu0 0
    %155 = vmatpush1.bf16.msra.mxu0 0
    %156 = vmatprep.subr.bf16.mxu0 0
    %157 = vmatpush1.bf16.msra.mxu0 0
    %158 = vmatprep.subr.bf16.mxu0 0
    %159 = vmatpush1.bf16.msra.mxu0 0
    %160 = vmatprep.subr.bf16.mxu0 0
    %161 = vmatpush1.bf16.msra.mxu0 0
    %162 = vmatprep.subr.bf16.mxu0 0
    %163 = vmatpush1.bf16.msra.mxu0 0
    %164 = vmatprep.subr.bf16.mxu0 0
    %165 = vmatpush1.bf16.msra.mxu0 0
    %166 = vmatprep.mubr.bf16.mxu0 0
    %167 = vmatmul.mubr.bf16.gmra.mrb[0].mxu0 %v132
    %v168 = vpop.f32.mrb[0].mxu0
    %v169 = vadd.f32 %v116, %v168
    %v170 = vpop.f32.mrb[0].mxu0
    %v171 = vpop.f32.mrb[0].mxu0
    %v172 = vadd.f32 %v116, %v171
    %v173 = vpop.f32.mrb[0].mxu0
    %174 = vdwg.mxu0
    %v175 = vmax.f32 %v169, 0.0
    %v176 = vmax.f32 %v172, 0.0
    %v177 = vpack.c.bf16 %v176, %v175
    %v178 = vld [vmem:[%s5] sm:$0xf]
    %v179 = vld [vmem:[%s5 + $0x4] sm:$0xf]
    %v180 = vld [vmem:[%s5 + $0x8] sm:$0xf]
    %v181 = vld [vmem:[%s5 + $0xc] sm:$0xf]
    %v182 = vld [vmem:[%s5 + $0x10] sm:$0xf]
    %v183 = vld [vmem:[%s5 + $0x14] sm:$0xf]
    %v184 = vld [vmem:[%s5 + $0x18] sm:$0xf]
    %v185 = vld [vmem:[%s5 + $0x1c] sm:$0xf]
    %v186 = vld [vmem:[%s6] sm:$0x1]
    %v188 = vlaneseq
    %v189 = vshrl.u32 %v188, 7
    %v190 = vsub.s32 0, %v189
    %v191 = vrot.slane %v186, %v190
    %v201 = vunpack.c.l.b16 %v178
    %v202 = vunpack.c.l.b16 %v179
    %v203 = vunpack.c.l.b16 %v180
    %v204 = vunpack.c.l.b16 %v181
    %v205 = vunpack.c.l.b16 %v182
    %v206 = vunpack.c.l.b16 %v183
    %v207 = vunpack.c.l.b16 %v184
    %v208 = vunpack.c.l.b16 %v185
    %v209 = vpack.c.b16 %v202, %v201
    %v210 = vpack.c.b16 %v204, %v203
    %v211 = vpack.c.b16 %v206, %v205
    %v212 = vpack.c.b16 %v208, %v207
    %vm217 = vcmask 523264
    %v219 = vsel %vm217, %v177, 0
    %221 = vmatprep.subr.bf16.mxu0 0
    %222 = vmatpush1.bf16.msra.mxu0 %v209
    %223 = vmatprep.subr.bf16.mxu0 0
    %224 = vmatpush1.bf16.msra.mxu0 %v210
    %225 = vmatprep.subr.bf16.mxu0 0
    %226 = vmatpush1.bf16.msra.mxu0 %v211
    %227 = vmatprep.subr.bf16.mxu0 0
    %228 = vmatpush1.bf16.msra.mxu0 %v212
    %229 = vmatprep.subr.bf16.mxu0 0
    %230 = vmatpush1.bf16.msra.mxu0 0
    %231 = vmatprep.subr.bf16.mxu0 0
    %232 = vmatpush1.bf16.msra.mxu0 0
    %233 = vmatprep.subr.bf16.mxu0 0
    %234 = vmatpush1.bf16.msra.mxu0 0
    %235 = vmatprep.subr.bf16.mxu0 0
    %236 = vmatpush1.bf16.msra.mxu0 0
    %237 = vmatprep.subr.bf16.mxu0 0
    %238 = vmatpush1.bf16.msra.mxu0 0
    %239 = vmatprep.subr.bf16.mxu0 0
    %240 = vmatpush1.bf16.msra.mxu0 0
    %241 = vmatprep.subr.bf16.mxu0 0
    %242 = vmatpush1.bf16.msra.mxu0 0
    %243 = vmatprep.subr.bf16.mxu0 0
    %244 = vmatpush1.bf16.msra.mxu0 0
    %245 = vmatprep.subr.bf16.mxu0 0
    %246 = vmatpush1.bf16.msra.mxu0 0
    %247 = vmatprep.subr.bf16.mxu0 0
    %248 = vmatpush1.bf16.msra.mxu0 0
    %249 = vmatprep.subr.bf16.mxu0 0
    %250 = vmatpush1.bf16.msra.mxu0 0
    %251 = vmatprep.subr.bf16.mxu0 0
    %252 = vmatpush1.bf16.msra.mxu0 0
    %253 = vmatprep.mubr.bf16.mxu0 0
    %254 = vmatmul.mubr.bf16.gmra.mrb[0].mxu0 %v219
    %v255 = vpop.f32.mrb[0].mxu0
    %v256 = vadd.f32 %v191, %v255
    %v257 = vpop.f32.mrb[0].mxu0
    %v258 = vpop.f32.mrb[0].mxu0
    %v259 = vadd.f32 %v191, %v258
    %v260 = vpop.f32.mrb[0].mxu0
    %261 = vdwg.mxu0
    %v262 = vpack.c.bf16 %v259, %v256
    %v264 = vunpack.c.l.b16 %v262
    %v265 = vunpack.c.h.b16 %v262
    %v266 = vpack.c.b16 %v264, %v264
    %v267 = vpack.c.b16 %v265, %v265
    %270 = vst [vmem:[%s7] sm:$0xf] %v266
    %271 = vst [vmem:[%s7 + $0x4] sm:$0xf] %v267
    // Predicated region
    $region34: #{_forward_impl.1} parent=1 // pred_check
      _
    $region35: #{_forward_impl.1} parent=1 // pred_check_branch
      %273 = sbr.rel (0) target = $region37
    $region36: #{_forward_impl.1} parent=1 // pred_region
      _
    $region37: #{_forward_impl.1} parent=1 // pred_fallthru
      _
    // Predicated region
    $region38: #{_forward_impl.1} parent=1 // pred_check
      _
    $region39: #{_forward_impl.1} parent=1 // pred_check_branch
      %275 = sbr.rel (0) target = $region41
    $region40: #{_forward_impl.1} parent=1 // pred_region
      _
    $region41: #{_forward_impl.1} parent=1 // pred_fallthru
      _
    %276 = vsyncpa [#allocation3], 1

</llo_original>
